<compile_context>
chip_gen: v7x
topology: tpu7x:2x2x1
jax: 0.10.0
libtpu: 0.0.40
codegen_flags: <defaults>
</compile_context>

<pallas_src>
import functools

import jax
import jax.numpy as jnp
from jax import lax
from jax.experimental import pallas as pl
from jax.experimental.pallas import tpu as pltpu


def _round_up(a, b):
    return ((a + b - 1) // b) * b


def _pad_value(dtype):
    dtype = jnp.dtype(dtype)
    if dtype == jnp.bool_:
        return False
    if jnp.issubdtype(dtype, jnp.floating):
        return float("-inf")
    return int(jnp.iinfo(dtype).min)


def _single_pass_kernel(x_ref, o_ref, *, hw, pad_val, needs_mask):
    # x_ref: (TM, TK) with TK covering the whole (128-rounded) spatial plane.
    x = x_ref[...]
    if needs_mask:
        cols = lax.broadcasted_iota(jnp.int32, x.shape, 1)
        x = jnp.where(cols < hw, x, pad_val)
    o_ref[...] = jnp.max(x, axis=-1, keepdims=True).reshape(o_ref.shape)


def _chunked_kernel(x_ref, o_ref, acc_ref, *, hw, tk, pad_val, needs_mask):
    # x_ref: (TM, TK) spatial chunk; acc_ref: (TM, 1) running per-row max.
    k = pl.program_id(1)
    nk = pl.num_programs(1)

    x = x_ref[...]
    if needs_mask:
        cols = lax.broadcasted_iota(jnp.int32, x.shape, 1) + k * tk
        x = jnp.where(cols < hw, x, pad_val)
    part = jnp.max(x, axis=-1, keepdims=True)

    @pl.when(k == 0)
    def _():
        acc_ref[...] = part

    @pl.when(k > 0)
    def _():
        acc_ref[...] = jnp.maximum(acc_ref[...], part)

    @pl.when(k == nk - 1)
    def _():
        o_ref[...] = acc_ref[...].reshape(o_ref.shape)


def fast_global_max_pooling(x, *, vmem_block_budget_bytes=8 * 1024 * 1024):
    """x: (N, C, H, W) -> (N, C); equivalent to torch.amax(x, dim=(2, 3))."""
    N, C, H, W = x.shape
    rows, hw = N * C, H * W
    dtype = x.dtype
    itemsize = jnp.dtype(dtype).itemsize
    # Sub-32-bit dtypes pack 2/4 rows per sublane -> round rows accordingly.
    sublane = {1: 32, 2: 16}.get(itemsize, 8)
    hw128 = _round_up(hw, 128)
    budget = int(vmem_block_budget_bytes)

    # ---- tile selection (budget-driven, no input padding) -------------------
    if rows <= 128:
        tm = _round_up(rows, sublane)                        # single row tile
        tk_budget = max(128, (budget // (tm * itemsize)) // 128 * 128)
        tk = min(hw128, tk_budget)
    else:
        if 128 * hw128 * itemsize <= budget:
            tk = hw128                                       # whole plane
        else:
            tk = min(hw128, 8192)                            # 32 KiB f32 runs
        tm = (budget // (tk * itemsize)) // 128 * 128
        tm = max(128, min(tm, 1024, _round_up(rows, 128)))
        # Keep >= 2 row tiles so the "parallel" axis can split across v7x's
        # two TensorCores (harmless on single-TC v5e/v6e).
        tm = min(tm, max(128, _round_up(pl.cdiv(rows, 2), 128)))

    grid_i = pl.cdiv(rows, tm)
    nk = pl.cdiv(hw, tk)
    rows_pad = grid_i * tm
    needs_mask = (hw % tk) != 0
    pad_val = _pad_value(dtype)

    x2 = x.reshape(rows, hw)

    block_bytes = tm * tk * itemsize
    vmem_limit = max(32 * 1024 * 1024, 3 * block_bytes)      # covers 2x blocks

    cost = pl.CostEstimate(
        flops=rows * hw,                                     # one cmp / elem
        transcendentals=0,
        bytes_accessed=(rows * hw + rows_pad) * itemsize,
    )

    if nk == 1:
        kernel = functools.partial(
            _single_pass_kernel, hw=hw, pad_val=pad_val, needs_mask=needs_mask)
        out = pl.pallas_call(
            kernel,
            out_shape=jax.ShapeDtypeStruct((1, rows_pad), dtype),
            grid=(grid_i,),
            in_specs=[pl.BlockSpec((tm, tk), lambda i: (i, 0))],
            out_specs=pl.BlockSpec((1, tm), lambda i: (0, i)),
            compiler_params=pltpu.CompilerParams(
                dimension_semantics=("parallel",),
                vmem_limit_bytes=vmem_limit,
            ),
            cost_estimate=cost,
        )(x2)
    else:
        kernel = functools.partial(
            _chunked_kernel, hw=hw, tk=tk, pad_val=pad_val,
            needs_mask=needs_mask)
        out = pl.pallas_call(
            kernel,
            out_shape=jax.ShapeDtypeStruct((1, rows_pad), dtype),
            grid=(grid_i, nk),
            in_specs=[pl.BlockSpec((tm, tk), lambda i, k: (i, k))],
            out_specs=pl.BlockSpec((1, tm), lambda i, k: (0, i)),
            scratch_shapes=[pltpu.VMEM((tm, 1), dtype)],
            compiler_params=pltpu.CompilerParams(
                dimension_semantics=("parallel", "arbitrary"),
                vmem_limit_bytes=vmem_limit,
            ),
            cost_estimate=cost,
        )(x2)

    return out[0, :rows].reshape(N, C)


if __name__ == "__main__":
    key = jax.random.PRNGKey(0)

    # Case 1: small NCHW input, spatial plane tiles exactly (no masking).
    x = jax.random.normal(key, (2, 4, 16, 16), dtype=jnp.float32)
    y = jax.block_until_ready(fast_global_max_pooling(x))
    y_ref = jnp.max(x, axis=(2, 3))
    assert y.shape == y_ref.shape == (2, 4)
    assert jnp.allclose(y, y_ref), "Pallas result mismatch (case 1)"

    # Case 2: ragged spatial size -> exercises in-kernel lane masking.
    k2 = jax.random.fold_in(key, 1)
    x2 = jax.random.normal(k2, (2, 3, 7, 9), dtype=jnp.float32)
    y2 = jax.block_until_ready(fast_global_max_pooling(x2))
    assert jnp.allclose(y2, jnp.max(x2, axis=(2, 3))), "mismatch (case 2)"

    # Case 3: tiny VMEM budget -> exercises the chunked (multi-k) kernel
    # with masking on the last spatial tile.
    k3 = jax.random.fold_in(key, 2)
    x3 = jax.random.normal(k3, (2, 4, 30, 50), dtype=jnp.float32)
    y3 = jax.block_until_ready(
        fast_global_max_pooling(x3, vmem_block_budget_bytes=16 * 1024))
    assert jnp.allclose(y3, jnp.max(x3, axis=(2, 3))), "mismatch (case 3)"

    print("KERNEL_OK")
</pallas_src>

<mosaic_0001>
module attributes {stable_mosaic.version = 11 : i64} {
  func.func @_single_pass_kernel(%arg0: i32, %arg1: memref<8x256xf32, #tpu.memory_space<vmem>>, %arg2: memref<1x8xf32, #tpu.memory_space<vmem>>) attributes {dimension_semantics = [#tpu.dimension_semantics<parallel>], iteration_bounds = array<i64: 1>, scalar_prefetch = 0 : i64, scratch_operands = 0 : i64, tpu.core_type = #tpu.core_type<tc>, window_params = [{transform_indices = @transform_0, window_bounds = array<i64: 8, 256>}, {transform_indices = @transform_1, window_bounds = array<i64: 1, 8>}]} {
    %c0 = arith.constant 0 : index
    %c0_0 = arith.constant 0 : index
    %0 = vector.load %arg1[%c0, %c0_0] : memref<8x256xf32, #tpu.memory_space<vmem>>, vector<8x256xf32>
    %cst = arith.constant dense<0xFF800000> : vector<8xf32>
    %1 = vector.multi_reduction <maximumf>, %0, %cst [1] : vector<8x256xf32> to vector<8xf32>
    %2 = vector.shape_cast %1 : vector<8xf32> to vector<8x1xf32>
    %3 = vector.shape_cast %2 : vector<8x1xf32> to vector<1x8xf32>
    %c0_1 = arith.constant 0 : index
    %c0_2 = arith.constant 0 : index
    %4 = vector.load %arg2[%c0_1, %c0_2] : memref<1x8xf32, #tpu.memory_space<vmem>>, vector<1x8xf32>
    tpu.vector_store %arg2[%c0_1, %c0_2], %3 {strides = array<i32>} : memref<1x8xf32, #tpu.memory_space<vmem>>, vector<1x8xf32>,
    return
  }
  func.func @transform_0(%arg0: i32) -> (i32, i32) {
    %c0_i32 = arith.constant 0 : i32
    %c0_i32_0 = arith.constant 0 : i32
    return %arg0, %c0_i32 : i32, i32
  }
  func.func @transform_1(%arg0: i32) -> (i32, i32) {
    %c0_i32 = arith.constant 0 : i32
    %c0_i32_0 = arith.constant 0 : i32
    return %c0_i32, %arg0 : i32, i32
  }
}

</mosaic_0001>

<llo_original>
// kernel: tpu_custom_call.1
$region0: #{tpu_custom_call.1}
  #allocation0 [shape = 'u32[]', space=smem, size = 0x4, offset = 0x4, fixed_abs, tag = 'smem constant byte address 0x4 - core index']
  #allocation1 [shape = 'u32[144,128]{1,0:T(1,128)}', space=vmem, size = 0x12000, scoped, tag = 'internal scratch']
  %s0 = inlined_call_operand.hbm [shape: f32[8,256], index: 0, kind: input, shape index: {}]
  %s1 = inlined_call_operand.hbm [shape: f32[1,8], index: 1, kind: output, shape index: {}]
  %s2 = sld [smem:[#allocation0]]
  $region18: #{tpu_custom_call.1} parent=0
    _
  %s4 = ssub.s32 1, %s2
  %s5 = scalar_select 0, %s4, %s2
  $region1: #{tpu_custom_call.1} parent=0
    #allocation2 [shape = 'u8[8192]{0}', space=vmem, size = 0x2000, scoped, tag = 'input window, operand 0, single buffered']
    #allocation3 [shape = 's32[1]{0}', space=sflag, size = 0x4, scoped, tag = 'scoped memory for tpu_custom_call.1']
    #allocation4 [shape = 's32[1]{0}', space=sflag, size = 0x4, scoped, tag = 'scoped memory for tpu_custom_call.1']
    #allocation5 [shape = 'u8[512]{0}', space=vmem, size = 0x400, scoped, tag = 'output window, operand 0, single buffered']
    %6 = vsyncpa [#allocation3], 0
    %7 = vsyncpa [#allocation4], 0
    // Predicated region
    $region2: #{tpu_custom_call.1} parent=1 // pred_check
      _
    $region3: #{tpu_custom_call.1} parent=1 // pred_check_branch
      %9 = sbr.rel (0) target = $region5
    $region4: #{tpu_custom_call.1} parent=1 // pred_region
      %s11 = ssub.s32 256, 256
      %12 = vsyncadd [#allocation3], %s11
      %s14 = sshll.u32 [#allocation2], 4
      %s15 = int_to_ptr.vmem [resolvable:$true] %s14
      %17 = dma.hbm_to_vmem [thread:$0]  %s0, 256, %s15, [#allocation3]
    $region5: #{tpu_custom_call.1} parent=1 // pred_fallthru
      _
    // Predicated region
    $region6: #{tpu_custom_call.1} parent=1 // pred_check
      _
    $region7: #{tpu_custom_call.1} parent=1 // pred_check_branch
      %19 = sbr.rel (0) target = $region9
    $region8: #{tpu_custom_call.1} parent=1 // pred_region
      %20 = dma.done [#allocation3], 256
    $region9: #{tpu_custom_call.1} parent=1 // pred_fallthru
      _
    %v21 = vld [vmem:[#allocation2] sm:$0xff]
    %v22 = vld [vmem:[#allocation2 + $0x8] sm:$0xff]
    %v23 = vmax.f32 %v21, %v22
    %24 = vmax.xlane.f32.xlu0 %v23
    %v25 = vpop.xlane.xlu0 %24
    %v27 = vlaneseq
    %v28 = vand.u32 %v27, 127
    %v29 = vlaneseq
    %v30 = vshrl.u32 %v29, 7
    %v31 = vsub.s32 %v28, %v30
    %v32 = vrot.slane %v25, %v31
    %vm34 = vcmask 57344
    %35 = vst.msk [vmem:[#allocation5] sm:$0x1] %vm34, %v32
    // Predicated region
    $region10: #{tpu_custom_call.1} parent=1 // pred_check
      _
    $region11: #{tpu_custom_call.1} parent=1 // pred_check_branch
      %37 = sbr.rel (0) target = $region13
    $region12: #{tpu_custom_call.1} parent=1 // pred_region
      %s39 = ssub.s32 16, 16
      %40 = vsyncadd [#allocation4], %s39
      %s42 = sshll.u32 [#allocation5], 4
      %s43 = int_to_ptr.vmem [resolvable:$true] %s42
      %45 = dma.vmem_to_hbm [thread:$0]  %s43, 16, %s1, [#allocation4]
    $region13: #{tpu_custom_call.1} parent=1 // pred_fallthru
      _
    // Predicated region
    $region14: #{tpu_custom_call.1} parent=1 // pred_check
      _
    $region15: #{tpu_custom_call.1} parent=1 // pred_check_branch
      %47 = sbr.rel (0) target = $region17
    $region16: #{tpu_custom_call.1} parent=1 // pred_region
      %48 = dma.done [#allocation4], 16
    $region17: #{tpu_custom_call.1} parent=1 // pred_fallthru
      _
    %49 = vsyncpa [#allocation3], 1
    %50 = vsyncpa [#allocation4], 1

</llo_original>
